<compile_context>
chip_gen: v5e
topology: v5e:2x2
jax: 0.10.0
libtpu: 0.0.40
codegen_flags: <defaults>
</compile_context>

<pallas_src>
import functools
import math

import jax
import jax.numpy as jnp
from jax import lax
from jax.experimental import pallas as pl
from jax.experimental.pallas import tpu as pltpu


_ONE_HOT_MAX_VOCAB = 2048         # MXU one-hot path up to this many rows
_MAX_BLOCK_TOKENS_ONEHOT = 512    # caps the (bt, vocab) one-hot intermediate
_MAX_BLOCK_TOKENS_GATHER = 1024
_VMEM_HEADROOM = 8 << 20          # slack for Mosaic internal scratch


def _round_up(x: int, m: int) -> int:
    return ((x + m - 1) // m) * m


def _vmem_capacity_bytes() -> int:
    """Physical VMEM of the current TPU generation (conservative fallback)."""
    try:
        return int(pltpu.get_tpu_info().vmem_capacity_bytes)
    except Exception:
        return 64 << 20   # v7x floor — safe on every generation


def _pick_block_tokens(n_tokens: int, align: int, max_bt: int) -> int:
    """Largest block <= max_bt that is a multiple of `align`; prefers divisors
    of n_tokens so the kernel writes exactly n_tokens rows and the wrapper
    never needs a padded-output slice copy."""
    max_bt = max(align, (max_bt // align) * align)
    if n_tokens <= max_bt:
        return _round_up(n_tokens, align)
    for bt in range(max_bt, align - 1, -align):
        if n_tokens % bt == 0:
            return bt
    return max_bt   # no aligned divisor: accept padding + slice


# ---------------------------------------------------------------------------
# Kernel A: small vocab -> one-hot matmul on the MXU.
# ---------------------------------------------------------------------------
def _onehot_kernel(ids_ref, lut_ref, out_ref, *, scale):
    # ids_ref: (block_tokens, 1) int32 in VMEM
    # lut_ref: (vocab, d_model), VMEM-resident (constant index_map +
    #          Buffered(1) -> DMA'd from HBM exactly once for the grid)
    # out_ref: (block_tokens, d_model)
    bt = out_ref.shape[0]
    vocab = lut_ref.shape[0]
    cols = lax.broadcasted_iota(jnp.int32, (bt, vocab), 1)
    one_hot = (ids_ref[...] == cols).astype(lut_ref.dtype)
    # NOTE: default MXU precision may evaluate an f32 x f32 matmul via bf16
    # passes; the one-hot selection itself is exact, only the table values can
    # be rounded at bf16 precision — acceptable for embeddings.
    acc = jnp.dot(one_hot, lut_ref[...], preferred_element_type=jnp.float32)
    out_ref[...] = (acc * scale).astype(out_ref.dtype)


# ---------------------------------------------------------------------------
# Kernel B: large vocab (table still VMEM-resident) -> grouped row gather.
# ---------------------------------------------------------------------------
def _gather_kernel(ids_ref, lut_ref, out_ref, *, scale, group):
    # ids_ref: (n_pad,) int32, scalar-prefetched into SMEM
    # lut_ref: (vocab, d_model), VMEM-resident (single buffer)
    # out_ref: (block_tokens, d_model)
    bt = out_ref.shape[0]
    base = pl.multiple_of(pl.program_id(0) * bt, bt)

    def body(g, carry):
        off = pl.multiple_of(g * group, group)
        # `group` (8 f32 / 16 bf16) rows per iteration: one unmasked,
        # sublane-dense store and one scale multiply per group instead of
        # 8/16 masked (1, d_model) stores.
        rows = [lut_ref[pl.ds(ids_ref[base + off + u], 1), :]
                for u in range(group)]
        blk = jnp.concatenate(rows, axis=0).astype(jnp.float32)
        out_ref[pl.ds(off, group), :] = (blk * scale).astype(out_ref.dtype)
        return carry

    lax.fori_loop(0, bt // group, body, 0)


# ---------------------------------------------------------------------------
# Wrapper
# ---------------------------------------------------------------------------
def embeddings_forward(ids: jax.Array, lut: jax.Array, *,
                       block_tokens: int | None = None,
                       use_one_hot: bool | None = None) -> jax.Array:
    """Pallas equivalent of `Embeddings.forward`: lut[ids] * sqrt(d_model)."""
    vocab, d_model = lut.shape
    lead_shape = tuple(ids.shape)
    n_tokens = int(math.prod(lead_shape)) if lead_shape else 1
    scale = math.sqrt(d_model)
    itemsize = jnp.dtype(lut.dtype).itemsize
    table_bytes = vocab * d_model * itemsize

    if use_one_hot is None:
        use_one_hot = vocab <= _ONE_HOT_MAX_VOCAB

    # 8 f32 rows (16 for 2-byte dtypes) fill a vreg's sublanes -> unmasked vst.
    group = max(8, 32 // itemsize)
    align = 8 if use_one_hot else group
    max_cap = _MAX_BLOCK_TOKENS_ONEHOT if use_one_hot else _MAX_BLOCK_TOKENS_GATHER

    vmem_cap = _vmem_capacity_bytes()

    def vmem_need(bt: int) -> int:
        out_tile = bt * d_model * itemsize
        ids_tile = bt * 4 if use_one_hot else 0
        onehot_tmp = 2 * bt * _round_up(vocab, 128) * 4 if use_one_hot else 0
        # Table single-buffered (Buffered(1)); out/ids double-buffered.
        return table_bytes + 2 * (out_tile + ids_tile) + onehot_tmp

    if vmem_need(align) + _VMEM_HEADROOM > vmem_cap:
        # TODO(synk): tables too large for VMEM (LLM-scale vocab, 64 MiB v7x)
        # need an HBM-resident manual DMA-gather kernel (pl.ANY +
        # pltpu.make_async_copy per-row prefetch); fall back to XLA gather.
        flat = jnp.clip(ids.reshape(-1).astype(jnp.int32), 0, vocab - 1)
        out = jnp.take(lut, flat, axis=0) * jnp.asarray(scale, lut.dtype)
        return out.reshape(*lead_shape, d_model)

    if block_tokens is None:
        max_bt = align
        while (max_bt * 2 <= max_cap
               and vmem_need(max_bt * 2) + _VMEM_HEADROOM <= vmem_cap):
            max_bt *= 2
        block_tokens = _pick_block_tokens(n_tokens, align, max_bt)
    block_tokens = max(align, _round_up(block_tokens, align))

    n_pad = _round_up(n_tokens, block_tokens)
    num_blocks = n_pad // block_tokens

    # Clamp ids (OOB ids would silently read valid rows; PyTorch would raise —
    # documented behavioral difference), pad so every grid step is full.
    flat_ids = jnp.clip(ids.reshape(-1).astype(jnp.int32), 0, vocab - 1)
    if n_pad != n_tokens:
        flat_ids = jnp.pad(flat_ids, (0, n_pad - n_tokens))

    out_bytes = n_pad * d_model * itemsize
    # Megacore "parallel" re-DMAs the resident table on every TensorCore
    # (v7x); only shard the token axis when output traffic dominates the table.
    dim_sem = (("parallel",) if (num_blocks > 1 and out_bytes >= 2 * table_bytes)
               else ("arbitrary",))

    vmem_limit = int(min(max(vmem_need(block_tokens) + _VMEM_HEADROOM, 32 << 20),
                         vmem_cap))
    compiler_params = pltpu.CompilerParams(
        dimension_semantics=dim_sem, vmem_limit_bytes=vmem_limit)
    flops = 2 * n_pad * vocab * d_model if use_one_hot else n_pad * d_model
    cost = pl.CostEstimate(flops=flops, transcendentals=0,
                           bytes_accessed=table_bytes + n_pad * 4 + out_bytes)
    out_shape = jax.ShapeDtypeStruct((n_pad, d_model), lut.dtype)

    if use_one_hot:
        out_flat = pl.pallas_call(
            functools.partial(_onehot_kernel, scale=scale),
            out_shape=out_shape,
            grid=(num_blocks,),
            in_specs=[
                pl.BlockSpec((block_tokens, 1), lambda i: (i, 0)),
                # Full table, constant block index, single VMEM buffer.
                pl.BlockSpec((vocab, d_model), lambda i: (0, 0),
                             pipeline_mode=pl.Buffered(1)),
            ],
            out_specs=pl.BlockSpec((block_tokens, d_model), lambda i: (i, 0)),
            compiler_params=compiler_params,
            cost_estimate=cost,
        )(flat_ids.reshape(n_pad, 1), lut)
    else:
        # TODO(synk): for extremely long sequences, the scalar-prefetched id
        # vector (next_pow2(4*n_pad) bytes of SMEM) should become per-block
        # SMEM tiles instead of a whole-array prefetch.
        grid_spec = pltpu.PrefetchScalarGridSpec(
            num_scalar_prefetch=1,
            grid=(num_blocks,),
            in_specs=[
                pl.BlockSpec((vocab, d_model), lambda i, ids_ref: (0, 0),
                             pipeline_mode=pl.Buffered(1)),
            ],
            out_specs=pl.BlockSpec((block_tokens, d_model),
                                   lambda i, ids_ref: (i, 0)),
        )
        out_flat = pl.pallas_call(
            functools.partial(_gather_kernel, scale=scale, group=group),
            out_shape=out_shape,
            grid_spec=grid_spec,
            compiler_params=compiler_params,
            cost_estimate=cost,
        )(flat_ids, lut)

    if n_pad != n_tokens:
        out_flat = out_flat[:n_tokens]
    return out_flat.reshape(*lead_shape, d_model)


if __name__ == "__main__":
    key = jax.random.PRNGKey(0)
    k_lut, k_ids, k_lut2, k_ids2 = jax.random.split(key, 4)

    # ---- Primary demo (module-consistent small shapes): one-hot/MXU path ----
    vocab, d_model, batch, seq = 50, 32, 2, 8
    lut = jax.random.normal(k_lut, (vocab, d_model), dtype=jnp.float32)  # N(0,1) init
    ids = jax.random.randint(k_ids, (batch, seq), 0, vocab, dtype=jnp.int32)

    out = jax.block_until_ready(embeddings_forward(ids, lut))
    ref = jnp.take(lut, ids, axis=0) * math.sqrt(d_model)
    assert out.shape == (batch, seq, d_model)
    # Default MXU precision may round the f32 table to bf16 inside the matmul,
    # so allow a bf16-level tolerance here (selection itself is exact).
    assert jnp.allclose(out, ref, rtol=1e-2, atol=5e-2), "one-hot path mismatch"

    # ---- Secondary check: large-vocab grouped-gather path -------------------
    vocab2, d_model2 = 4096, 128
    lut2 = jax.random.normal(k_lut2, (vocab2, d_model2), dtype=jnp.float32)
    ids2 = jax.random.randint(k_ids2, (batch, seq), 0, vocab2, dtype=jnp.int32)

    out2 = jax.block_until_ready(embeddings_forward(ids2, lut2))
    ref2 = jnp.take(lut2, ids2, axis=0) * math.sqrt(d_model2)
    assert out2.shape == (batch, seq, d_model2)
    assert jnp.allclose(out2, ref2, rtol=1e-6, atol=1e-6), "gather path mismatch"

    print("KERNEL_OK")
</pallas_src>

<mosaic_0001>
module attributes {stable_mosaic.version = 11 : i64} {
  func.func @_onehot_kernel(%arg0: i32, %arg1: memref<16x1xi32, #tpu.memory_space<vmem>>, %arg2: memref<50x32xf32, #tpu.memory_space<vmem>>, %arg3: memref<16x32xf32, #tpu.memory_space<vmem>>) attributes {dimension_semantics = [#tpu.dimension_semantics<arbitrary>], iteration_bounds = array<i64: 1>, scalar_prefetch = 0 : i64, scratch_operands = 0 : i64, tpu.core_type = #tpu.core_type<tc>, window_params = [{transform_indices = @transform_0, window_bounds = array<i64: 16, 1>}, {pipeline_mode = #tpu.pipeline_mode<synchronous>, transform_indices = @transform_1, window_bounds = array<i64: 50, 32>}, {transform_indices = @transform_2, window_bounds = array<i64: 16, 32>}]} {
    %0 = tpu.iota {dimensions = array<i32: 1>} : vector<16x50xi32>
    %c0 = arith.constant 0 : index
    %c0_0 = arith.constant 0 : index
    %1 = vector.load %arg1[%c0, %c0_0] : memref<16x1xi32, #tpu.memory_space<vmem>>, vector<16x1xi32>
    %2 = vector.broadcast %1 : vector<16x1xi32> to vector<16x50xi32>
    %3 = arith.cmpi eq, %2, %0 : vector<16x50xi32>
    %4 = arith.extui %3 : vector<16x50xi1> to vector<16x50xi32>
    %5 = arith.sitofp %4 : vector<16x50xi32> to vector<16x50xf32>
    %c0_1 = arith.constant 0 : index
    %c0_2 = arith.constant 0 : index
    %6 = vector.load %arg2[%c0_1, %c0_2] : memref<50x32xf32, #tpu.memory_space<vmem>>, vector<50x32xf32>
    %cst = arith.constant dense<0.000000e+00> : vector<16x32xf32>
    %7 = tpu.matmul %5, %6, %cst {dimension_numbers = #tpu.dot_dimension_numbers<[1], [0], [0], [1], [0, 0, 1, 1], [], []>} : vector<16x50xf32>, vector<50x32xf32>, vector<16x32xf32> -> vector<16x32xf32>
    %cst_3 = arith.constant 5.65685415 : f32
    %8 = vector.broadcast %cst_3 : f32 to vector<16x32xf32>
    %9 = arith.mulf %7, %8 : vector<16x32xf32>
    %c0_4 = arith.constant 0 : index
    %c0_5 = arith.constant 0 : index
    %10 = vector.load %arg3[%c0_4, %c0_5] : memref<16x32xf32, #tpu.memory_space<vmem>>, vector<16x32xf32>
    tpu.vector_store %arg3[%c0_4, %c0_5], %9 {strides = array<i32>} : memref<16x32xf32, #tpu.memory_space<vmem>>, vector<16x32xf32>,
    return
  }
  func.func @transform_0(%arg0: i32) -> (i32, i32) {
    %c0_i32 = arith.constant 0 : i32
    %c0_i32_0 = arith.constant 0 : i32
    return %arg0, %c0_i32 : i32, i32
  }
  func.func @transform_1(%arg0: i32) -> (i32, i32) {
    %c0_i32 = arith.constant 0 : i32
    %c0_i32_0 = arith.constant 0 : i32
    %c0_i32_1 = arith.constant 0 : i32
    return %c0_i32, %c0_i32_0 : i32, i32
  }
  func.func @transform_2(%arg0: i32) -> (i32, i32) {
    %c0_i32 = arith.constant 0 : i32
    %c0_i32_0 = arith.constant 0 : i32
    return %arg0, %c0_i32 : i32, i32
  }
}

</mosaic_0001>

<llo_original>
// kernel: tpu_custom_call.1
$region0: #{tpu_custom_call.1}
  #allocation0 [shape = 'u32[]', space=smem, size = 0x4, offset = 0x4, fixed_abs, tag = 'smem constant byte address 0x4 - core index']
  #allocation1 [shape = 'u32[72,128]{1,0:T(1,128)}', space=vmem, size = 0x9000, scoped, tag = 'internal scratch']
  %s0 = inlined_call_operand.vmem [shape: s32[16,1], index: 0, kind: input, shape index: {}]
  %s1 = inlined_call_operand.vmem [shape: f32[50,32], index: 1, kind: input, shape index: {}]
  %s2 = inlined_call_operand.hbm [shape: f32[16,32], index: 2, kind: output, shape index: {}]
  %s3 = sld [smem:[#allocation0]]
  $region18: #{tpu_custom_call.1} parent=0
    _
  %s5 = ssub.s32 1, %s3
  %s6 = scalar_select 0, %s5, %s3
  $region1: #{tpu_custom_call.1} parent=0
    #allocation2 [shape = 'u8[8192]{0}', space=vmem, size = 0x2000, scoped, tag = 'output window, operand 0, single buffered']
    #allocation3 [shape = 's32[1]{0}', space=sflag, size = 0x4, scoped, tag = 'scoped memory for tpu_custom_call.1']
    %7 = vsyncpa [#allocation3], 0
    // Predicated region
    $region2: #{tpu_custom_call.1} parent=1 // pred_check
      _
    $region3: #{tpu_custom_call.1} parent=1 // pred_check_branch
      %9 = sbr.rel (0) target = $region5
    $region4: #{tpu_custom_call.1} parent=1 // pred_region
      _
    $region5: #{tpu_custom_call.1} parent=1 // pred_fallthru
      _
    // Predicated region
    $region6: #{tpu_custom_call.1} parent=1 // pred_check
      _
    $region7: #{tpu_custom_call.1} parent=1 // pred_check_branch
      %11 = sbr.rel (0) target = $region9
    $region8: #{tpu_custom_call.1} parent=1 // pred_region
      _
    $region9: #{tpu_custom_call.1} parent=1 // pred_fallthru
      _
    %v12 = vlaneseq
    %v13 = vand.u32 %v12, 127
    %v14 = vld [vmem:[%s0] sm:$0xff]
    %v15 = vld [vmem:[%s0 + $0x8] sm:$0xff]
    %16 = vset.pattern.permute.xlu0 0
    %17 = vperm.xlu0 %16, %v14
    %v18 = vpop.permute.xlu0 %17
    %19 = vset.pattern.permute.xlu0 0
    %20 = vperm.xlu0 %19, %v15
    %v21 = vpop.permute.xlu0 %20
    %vm22 = vcmp.eq.s32.totalorder %v18, %v13
    %vm23 = vcmp.eq.s32.totalorder %v21, %v13
    %v24 = vsel %vm22, 1, 0
    %v25 = vsel %vm23, 1, 0
    %v26 = vcvt.s32.f32 %v24
    %v27 = vcvt.s32.f32 %v25
    %v28 = vld [vmem:[%s1] sm:$0xff]
    %v29 = vld [vmem:[%s1 + $0x8] sm:$0xff]
    %v30 = vld [vmem:[%s1 + $0x10] sm:$0xff]
    %v31 = vld [vmem:[%s1 + $0x18] sm:$0xff]
    %v32 = vld [vmem:[%s1 + $0x20] sm:$0xff]
    %v33 = vld [vmem:[%s1 + $0x28] sm:$0xff]
    %v34 = vld [vmem:[%s1 + $0x30] sm:$0x3]
    %vm35 = vcmask 408576
    %v37 = vsel %vm35, %v26, 0
    %v40 = vsel %vm35, %v27, 0
    %vm42 = vcmask 1041408
    %v44 = vsel %vm42, %v34, 0
    %46 = vmatpush.msra.mxu0 0.0
    %47 = vmatpush.msra.mxu0 0.0
    %48 = vmatpush.msra.mxu0 0.0
    %49 = vmatpush.msra.mxu0 0.0
    %50 = vmatpush.msra.mxu0 0.0
    %51 = vmatpush.msra.mxu0 0.0
    %52 = vmatpush.msra.mxu0 0.0
    %53 = vmatpush.msra.mxu0 0.0
    %54 = vmatpush.msra.mxu0 0.0
    %55 = vmatpush.msra.mxu0 %v44
    %56 = vmatpush.msra.mxu0 %v33
    %57 = vmatpush.msra.mxu0 %v32
    %58 = vmatpush.msra.mxu0 %v31
    %59 = vmatpush.msra.mxu0 %v30
    %60 = vmatpush.msra.mxu0 %v29
    %61 = vmatpush.msra.mxu0 %v28
    %62 = vmatmul.f32.gmra.mxu0 %v37
    %v63 = vpop.f32.mrf.mxu0
    %v64 = vadd.f32 0.0, %v63
    %65 = vmatmul.f32.gmra.mxu0 %v40
    %v66 = vpop.f32.mrf.mxu0
    %v67 = vadd.f32 0.0, %v66
    %68 = vdwg.mxu0
    %v69 = vmul.f32 %v64, 5.656854
    %v70 = vmul.f32 %v67, 5.656854
    %vm71 = vcmask 261120
    %72 = vst.msk [vmem:[#allocation2] sm:$0xff] %vm71, %v69
    %73 = vst.msk [vmem:[#allocation2 + $0x8] sm:$0xff] %vm71, %v70
    // Predicated region
    $region10: #{tpu_custom_call.1} parent=1 // pred_check
      _
    $region11: #{tpu_custom_call.1} parent=1 // pred_check_branch
      %75 = sbr.rel (0) target = $region13
    $region12: #{tpu_custom_call.1} parent=1 // pred_region
      %77 = vsyncadd [#allocation3], 0
      %s78 = sshll.u32 [#allocation2], 4
      %s79 = int_to_ptr.vmem [resolvable:$true] %s78
      %s80 = sshll.u32 %s2, 4
      %s81 = int_to_ptr.hbm [resolvable:$true] %s80
      %86 = dma.vmem_to_hbm [thread:$0]  %s79, 256, %s81, [#allocation3], 128, 128, 8
    $region13: #{tpu_custom_call.1} parent=1 // pred_fallthru
      _
    // Predicated region
    $region14: #{tpu_custom_call.1} parent=1 // pred_check
      _
    $region15: #{tpu_custom_call.1} parent=1 // pred_check_branch
      %88 = sbr.rel (0) target = $region17
    $region16: #{tpu_custom_call.1} parent=1 // pred_region
      %90 = dma.done [#allocation3], 256
    $region17: #{tpu_custom_call.1} parent=1 // pred_fallthru
      _
    %91 = vsyncpa [#allocation3], 1

</llo_original>
